<compile_context>
chip_gen: v6e
topology: v6e:2x2x1
jax: 0.10.0
libtpu: 0.0.40
codegen_flags: <defaults>
</compile_context>

<pallas_src>
import functools

import jax
import jax.numpy as jnp
import numpy as np
from jax.experimental import pallas as pl
from jax.experimental.pallas import tpu as pltpu


def lstm_fc_kernel(x_ref, wpack_ref, fcpack_ref, out_ref, *, B, T, D, H):
    # ---- Static slices of the packed operands (all row offsets are 8-aligned). ----
    wih = wpack_ref[0:D, :]                    # (D, 4H)   input->gates weights (W_ih^T)
    whh = wpack_ref[D:D + H, :]                # (H, 4H)   hidden->gates weights (W_hh^T)
    bias = wpack_ref[D + H:D + H + 1, :]       # (1, 4H)   b_ih + b_hh
    wfc = fcpack_ref[0:H, :]                   # (H, O)    fc weight (W_fc^T)
    bfc = fcpack_ref[H:H + 1, :]               # (1, O)    fc bias

    # ---- Input projection for ALL timesteps: one MXU matmul, bias folded in.
    # x is flat time-major (T*B, D); gx stays flat (T*B, 4H) — no reshape needed. ----
    gx = jnp.dot(x_ref[...], wih, preferred_element_type=jnp.float32) + bias

    h = jnp.zeros((B, H), jnp.float32)
    c = jnp.zeros((B, H), jnp.float32)

    # ---- Recurrence: fully unrolled (T static & small). Only h @ W_hh^T and the
    # activations remain on the serial dependency chain. ----
    for t in range(T):
        gates = gx[t * B:(t + 1) * B, :] + jnp.dot(
            h, whh, preferred_element_type=jnp.float32)          # (B, 4H) — one vreg
        sg = jax.nn.sigmoid(gates)     # one EUP push for i, f, o lanes
        tg = jnp.tanh(gates)           # one EUP push for the g lanes
        i = sg[:, 0:H]
        f = sg[:, H:2 * H]
        g = tg[:, 2 * H:3 * H]
        o = sg[:, 3 * H:4 * H]
        c = f * c + i * g
        h = o * jnp.tanh(c)

    # ---- Final Linear on the last hidden state (hn[-1]). ----
    out_ref[...] = jnp.dot(h, wfc, preferred_element_type=jnp.float32) + bfc


def lstm_model_forward(x_btd, wih_t, whh_t, bias, wfc_t, bfc):
    """x_btd: (B, T, D) float32 (batch_first, as in PyTorch). Returns (B, O)."""
    B, T, D = x_btd.shape
    H = whh_t.shape[0]
    O = wfc_t.shape[1]

    # Time-major flatten in the wrapper: step t occupies rows [t*B, (t+1)*B) as
    # contiguous sublanes inside the kernel. (Tiny one-off transpose, off the kernel.)
    x_tm = jnp.transpose(x_btd, (1, 0, 2)).reshape(T * B, D)

    # Pack the small operands: 6 HBM->VMEM DMAs -> 3.
    wpack = jnp.concatenate(
        [wih_t, whh_t, jnp.reshape(bias, (1, 4 * H))], axis=0)   # (D+H+1, 4H)
    fcpack = jnp.concatenate(
        [wfc_t, jnp.reshape(bfc, (1, O))], axis=0)               # (H+1, O)

    kernel = functools.partial(lstm_fc_kernel, B=B, T=T, D=D, H=H)

    # T == 0 would leave out_ref unwritten; nn.LSTM rejects empty sequences too,
    # so it is unreachable for this model.
    return pl.pallas_call(
        kernel,
        out_shape=jax.ShapeDtypeStruct((B, O), jnp.float32),
        in_specs=[pl.BlockSpec(memory_space=pltpu.MemorySpace.VMEM)
                  for _ in range(3)],
        out_specs=pl.BlockSpec(memory_space=pltpu.MemorySpace.VMEM),
    )(x_tm, wpack, fcpack)


def lstm_model_reference(x_btd, wih_t, whh_t, bias, wfc_t, bfc):
    """Pure-JAX reference mirroring torch.nn.LSTM + Linear semantics."""
    B, T, D = x_btd.shape
    H = whh_t.shape[0]
    h = jnp.zeros((B, H), jnp.float32)
    c = jnp.zeros((B, H), jnp.float32)
    bias = jnp.reshape(bias, (1, 4 * H))
    bfc = jnp.reshape(bfc, (1, -1))

    def step(carry, x_t):
        h, c = carry
        gates = x_t @ wih_t + h @ whh_t + bias
        i = jax.nn.sigmoid(gates[:, 0:H])
        f = jax.nn.sigmoid(gates[:, H:2 * H])
        g = jnp.tanh(gates[:, 2 * H:3 * H])
        o = jax.nn.sigmoid(gates[:, 3 * H:4 * H])
        c = f * c + i * g
        h = o * jnp.tanh(c)
        return (h, c), None

    (h, _), _ = jax.lax.scan(step, (h, c), jnp.transpose(x_btd, (1, 0, 2)))
    return h @ wfc_t + bfc


if __name__ == "__main__":
    # Small shapes consistent with the module's forward (batch_first LSTM + Linear).
    B, T, D, H, O = 2, 8, 16, 32, 8

    key = jax.random.PRNGKey(0)
    ks = jax.random.split(key, 7)
    scale = 1.0 / np.sqrt(H)  # matches torch LSTM/Linear default init range

    x = jax.random.normal(ks[0], (B, T, D), jnp.float32)

    # PyTorch stores W_ih (4H, D), W_hh (4H, H), fc.weight (O, H); we pass transposes.
    w_ih = jax.random.uniform(ks[1], (4 * H, D), jnp.float32, -scale, scale)
    w_hh = jax.random.uniform(ks[2], (4 * H, H), jnp.float32, -scale, scale)
    b_ih = jax.random.uniform(ks[3], (4 * H,), jnp.float32, -scale, scale)
    b_hh = jax.random.uniform(ks[4], (4 * H,), jnp.float32, -scale, scale)
    w_fc = jax.random.uniform(ks[5], (O, H), jnp.float32, -scale, scale)
    b_fc = jax.random.uniform(ks[6], (O,), jnp.float32, -scale, scale)

    wih_t = jnp.transpose(w_ih)             # (D, 4H)
    whh_t = jnp.transpose(w_hh)             # (H, 4H)
    bias = b_ih + b_hh                      # (4H,)
    wfc_t = jnp.transpose(w_fc)             # (H, O)
    bfc = b_fc                              # (O,)

    out = lstm_model_forward(x, wih_t, whh_t, bias, wfc_t, bfc)
    out = jax.block_until_ready(out)

    ref = lstm_model_reference(x, wih_t, whh_t, bias, wfc_t, bfc)
    np.testing.assert_allclose(np.asarray(out), np.asarray(ref),
                               rtol=1e-5, atol=1e-5)

    print("KERNEL_OK")
</pallas_src>

<mosaic_0001>
module attributes {stable_mosaic.version = 11 : i64} {
  func.func @lstm_fc_kernel(%arg0: memref<16x16xf32, #tpu.memory_space<vmem>>, %arg1: memref<49x128xf32, #tpu.memory_space<vmem>>, %arg2: memref<33x8xf32, #tpu.memory_space<vmem>>, %arg3: memref<2x8xf32, #tpu.memory_space<vmem>>) attributes {dimension_semantics = [], scalar_prefetch = 0 : i64, scratch_operands = 0 : i64, tpu.core_type = #tpu.core_type<tc>} {
    %c0 = arith.constant 0 : index
    %c0_0 = arith.constant 0 : index
    %0 = vector.load %arg1[%c0, %c0_0] : memref<49x128xf32, #tpu.memory_space<vmem>>, vector<16x128xf32>
    %c16 = arith.constant 16 : index
    %c0_1 = arith.constant 0 : index
    %1 = vector.load %arg1[%c16, %c0_1] : memref<49x128xf32, #tpu.memory_space<vmem>>, vector<32x128xf32>
    %c48 = arith.constant 48 : index
    %c0_2 = arith.constant 0 : index
    %2 = vector.load %arg1[%c48, %c0_2] : memref<49x128xf32, #tpu.memory_space<vmem>>, vector<1x128xf32>
    %c0_3 = arith.constant 0 : index
    %c0_4 = arith.constant 0 : index
    %3 = vector.load %arg2[%c0_3, %c0_4] : memref<33x8xf32, #tpu.memory_space<vmem>>, vector<32x8xf32>
    %c32 = arith.constant 32 : index
    %c0_5 = arith.constant 0 : index
    %4 = vector.load %arg2[%c32, %c0_5] : memref<33x8xf32, #tpu.memory_space<vmem>>, vector<1x8xf32>
    %c0_6 = arith.constant 0 : index
    %c0_7 = arith.constant 0 : index
    %5 = vector.load %arg0[%c0_6, %c0_7] : memref<16x16xf32, #tpu.memory_space<vmem>>, vector<16x16xf32>
    %cst = arith.constant dense<0.000000e+00> : vector<16x128xf32>
    %6 = tpu.matmul %5, %0, %cst {dimension_numbers = #tpu.dot_dimension_numbers<[1], [0], [0], [1], [0, 0, 1, 1], [], []>} : vector<16x16xf32>, vector<16x128xf32>, vector<16x128xf32> -> vector<16x128xf32>
    %7 = vector.broadcast %2 : vector<1x128xf32> to vector<16x128xf32>
    %8 = arith.addf %6, %7 : vector<16x128xf32>
    %cst_8 = arith.constant 0.000000e+00 : f32
    %9 = vector.broadcast %cst_8 : f32 to vector<2x32xf32>
    %cst_9 = arith.constant 0.000000e+00 : f32
    %10 = vector.broadcast %cst_9 : f32 to vector<2x32xf32>
    %11 = vector.extract_strided_slice %8 {offsets = [0, 0], sizes = [2, 128], strides = [1, 1]} : vector<16x128xf32> to vector<2x128xf32>
    %cst_10 = arith.constant dense<0.000000e+00> : vector<2x128xf32>
    %12 = tpu.matmul %9, %1, %cst_10 {dimension_numbers = #tpu.dot_dimension_numbers<[1], [0], [0], [1], [0, 0, 1, 1], [], []>} : vector<2x32xf32>, vector<32x128xf32>, vector<2x128xf32> -> vector<2x128xf32>
    %13 = arith.addf %11, %12 : vector<2x128xf32>
    %14 = arith.negf %13 : vector<2x128xf32>
    %15 = math.exp %14 : vector<2x128xf32>
    %cst_11 = arith.constant 1.000000e+00 : f32
    %16 = vector.broadcast %cst_11 : f32 to vector<2x128xf32>
    %17 = arith.addf %16, %15 : vector<2x128xf32>
    %18 = arith.divf %16, %17 : vector<2x128xf32>
    %19 = math.tanh %13 : vector<2x128xf32>
    %20 = vector.extract_strided_slice %18 {offsets = [0, 0], sizes = [2, 32], strides = [1, 1]} : vector<2x128xf32> to vector<2x32xf32>
    %21 = vector.extract_strided_slice %18 {offsets = [0, 32], sizes = [2, 32], strides = [1, 1]} : vector<2x128xf32> to vector<2x32xf32>
    %22 = vector.extract_strided_slice %19 {offsets = [0, 64], sizes = [2, 32], strides = [1, 1]} : vector<2x128xf32> to vector<2x32xf32>
    %23 = vector.extract_strided_slice %18 {offsets = [0, 96], sizes = [2, 32], strides = [1, 1]} : vector<2x128xf32> to vector<2x32xf32>
    %24 = arith.mulf %21, %10 : vector<2x32xf32>
    %25 = arith.mulf %20, %22 : vector<2x32xf32>
    %26 = arith.addf %24, %25 : vector<2x32xf32>
    %27 = math.tanh %26 : vector<2x32xf32>
    %28 = arith.mulf %23, %27 : vector<2x32xf32>
    %29 = vector.extract_strided_slice %8 {offsets = [2, 0], sizes = [2, 128], strides = [1, 1]} : vector<16x128xf32> to vector<2x128xf32>
    %cst_12 = arith.constant dense<0.000000e+00> : vector<2x128xf32>
    %30 = tpu.matmul %28, %1, %cst_12 {dimension_numbers = #tpu.dot_dimension_numbers<[1], [0], [0], [1], [0, 0, 1, 1], [], []>} : vector<2x32xf32>, vector<32x128xf32>, vector<2x128xf32> -> vector<2x128xf32>
    %31 = arith.addf %29, %30 : vector<2x128xf32>
    %32 = arith.negf %31 : vector<2x128xf32>
    %33 = math.exp %32 : vector<2x128xf32>
    %cst_13 = arith.constant 1.000000e+00 : f32
    %34 = vector.broadcast %cst_13 : f32 to vector<2x128xf32>
    %35 = arith.addf %34, %33 : vector<2x128xf32>
    %36 = arith.divf %34, %35 : vector<2x128xf32>
    %37 = math.tanh %31 : vector<2x128xf32>
    %38 = vector.extract_strided_slice %36 {offsets = [0, 0], sizes = [2, 32], strides = [1, 1]} : vector<2x128xf32> to vector<2x32xf32>
    %39 = vector.extract_strided_slice %36 {offsets = [0, 32], sizes = [2, 32], strides = [1, 1]} : vector<2x128xf32> to vector<2x32xf32>
    %40 = vector.extract_strided_slice %37 {offsets = [0, 64], sizes = [2, 32], strides = [1, 1]} : vector<2x128xf32> to vector<2x32xf32>
    %41 = vector.extract_strided_slice %36 {offsets = [0, 96], sizes = [2, 32], strides = [1, 1]} : vector<2x128xf32> to vector<2x32xf32>
    %42 = arith.mulf %39, %26 : vector<2x32xf32>
    %43 = arith.mulf %38, %40 : vector<2x32xf32>
    %44 = arith.addf %42, %43 : vector<2x32xf32>
    %45 = math.tanh %44 : vector<2x32xf32>
    %46 = arith.mulf %41, %45 : vector<2x32xf32>
    %47 = vector.extract_strided_slice %8 {offsets = [4, 0], sizes = [2, 128], strides = [1, 1]} : vector<16x128xf32> to vector<2x128xf32>
    %cst_14 = arith.constant dense<0.000000e+00> : vector<2x128xf32>
    %48 = tpu.matmul %46, %1, %cst_14 {dimension_numbers = #tpu.dot_dimension_numbers<[1], [0], [0], [1], [0, 0, 1, 1], [], []>} : vector<2x32xf32>, vector<32x128xf32>, vector<2x128xf32> -> vector<2x128xf32>
    %49 = arith.addf %47, %48 : vector<2x128xf32>
    %50 = arith.negf %49 : vector<2x128xf32>
    %51 = math.exp %50 : vector<2x128xf32>
    %cst_15 = arith.constant 1.000000e+00 : f32
    %52 = vector.broadcast %cst_15 : f32 to vector<2x128xf32>
    %53 = arith.addf %52, %51 : vector<2x128xf32>
    %54 = arith.divf %52, %53 : vector<2x128xf32>
    %55 = math.tanh %49 : vector<2x128xf32>
    %56 = vector.extract_strided_slice %54 {offsets = [0, 0], sizes = [2, 32], strides = [1, 1]} : vector<2x128xf32> to vector<2x32xf32>
    %57 = vector.extract_strided_slice %54 {offsets = [0, 32], sizes = [2, 32], strides = [1, 1]} : vector<2x128xf32> to vector<2x32xf32>
    %58 = vector.extract_strided_slice %55 {offsets = [0, 64], sizes = [2, 32], strides = [1, 1]} : vector<2x128xf32> to vector<2x32xf32>
    %59 = vector.extract_strided_slice %54 {offsets = [0, 96], sizes = [2, 32], strides = [1, 1]} : vector<2x128xf32> to vector<2x32xf32>
    %60 = arith.mulf %57, %44 : vector<2x32xf32>
    %61 = arith.mulf %56, %58 : vector<2x32xf32>
    %62 = arith.addf %60, %61 : vector<2x32xf32>
    %63 = math.tanh %62 : vector<2x32xf32>
    %64 = arith.mulf %59, %63 : vector<2x32xf32>
    %65 = vector.extract_strided_slice %8 {offsets = [6, 0], sizes = [2, 128], strides = [1, 1]} : vector<16x128xf32> to vector<2x128xf32>
    %cst_16 = arith.constant dense<0.000000e+00> : vector<2x128xf32>
    %66 = tpu.matmul %64, %1, %cst_16 {dimension_numbers = #tpu.dot_dimension_numbers<[1], [0], [0], [1], [0, 0, 1, 1], [], []>} : vector<2x32xf32>, vector<32x128xf32>, vector<2x128xf32> -> vector<2x128xf32>
    %67 = arith.addf %65, %66 : vector<2x128xf32>
    %68 = arith.negf %67 : vector<2x128xf32>
    %69 = math.exp %68 : vector<2x128xf32>
    %cst_17 = arith.constant 1.000000e+00 : f32
    %70 = vector.broadcast %cst_17 : f32 to vector<2x128xf32>
    %71 = arith.addf %70, %69 : vector<2x128xf32>
    %72 = arith.divf %70, %71 : vector<2x128xf32>
    %73 = math.tanh %67 : vector<2x128xf32>
    %74 = vector.extract_strided_slice %72 {offsets = [0, 0], sizes = [2, 32], strides = [1, 1]} : vector<2x128xf32> to vector<2x32xf32>
    %75 = vector.extract_strided_slice %72 {offsets = [0, 32], sizes = [2, 32], strides = [1, 1]} : vector<2x128xf32> to vector<2x32xf32>
    %76 = vector.extract_strided_slice %73 {offsets = [0, 64], sizes = [2, 32], strides = [1, 1]} : vector<2x128xf32> to vector<2x32xf32>
    %77 = vector.extract_strided_slice %72 {offsets = [0, 96], sizes = [2, 32], strides = [1, 1]} : vector<2x128xf32> to vector<2x32xf32>
    %78 = arith.mulf %75, %62 : vector<2x32xf32>
    %79 = arith.mulf %74, %76 : vector<2x32xf32>
    %80 = arith.addf %78, %79 : vector<2x32xf32>
    %81 = math.tanh %80 : vector<2x32xf32>
    %82 = arith.mulf %77, %81 : vector<2x32xf32>
    %83 = vector.extract_strided_slice %8 {offsets = [8, 0], sizes = [2, 128], strides = [1, 1]} : vector<16x128xf32> to vector<2x128xf32>
    %cst_18 = arith.constant dense<0.000000e+00> : vector<2x128xf32>
    %84 = tpu.matmul %82, %1, %cst_18 {dimension_numbers = #tpu.dot_dimension_numbers<[1], [0], [0], [1], [0, 0, 1, 1], [], []>} : vector<2x32xf32>, vector<32x128xf32>, vector<2x128xf32> -> vector<2x128xf32>
    %85 = arith.addf %83, %84 : vector<2x128xf32>
    %86 = arith.negf %85 : vector<2x128xf32>
    %87 = math.exp %86 : vector<2x128xf32>
    %cst_19 = arith.constant 1.000000e+00 : f32
    %88 = vector.broadcast %cst_19 : f32 to vector<2x128xf32>
    %89 = arith.addf %88, %87 : vector<2x128xf32>
    %90 = arith.divf %88, %89 : vector<2x128xf32>
    %91 = math.tanh %85 : vector<2x128xf32>
    %92 = vector.extract_strided_slice %90 {offsets = [0, 0], sizes = [2, 32], strides = [1, 1]} : vector<2x128xf32> to vector<2x32xf32>
    %93 = vector.extract_strided_slice %90 {offsets = [0, 32], sizes = [2, 32], strides = [1, 1]} : vector<2x128xf32> to vector<2x32xf32>
    %94 = vector.extract_strided_slice %91 {offsets = [0, 64], sizes = [2, 32], strides = [1, 1]} : vector<2x128xf32> to vector<2x32xf32>
    %95 = vector.extract_strided_slice %90 {offsets = [0, 96], sizes = [2, 32], strides = [1, 1]} : vector<2x128xf32> to vector<2x32xf32>
    %96 = arith.mulf %93, %80 : vector<2x32xf32>
    %97 = arith.mulf %92, %94 : vector<2x32xf32>
    %98 = arith.addf %96, %97 : vector<2x32xf32>
    %99 = math.tanh %98 : vector<2x32xf32>
    %100 = arith.mulf %95, %99 : vector<2x32xf32>
    %101 = vector.extract_strided_slice %8 {offsets = [10, 0], sizes = [2, 128], strides = [1, 1]} : vector<16x128xf32> to vector<2x128xf32>
    %cst_20 = arith.constant dense<0.000000e+00> : vector<2x128xf32>
    %102 = tpu.matmul %100, %1, %cst_20 {dimension_numbers = #tpu.dot_dimension_numbers<[1], [0], [0], [1], [0, 0, 1, 1], [], []>} : vector<2x32xf32>, vector<32x128xf32>, vector<2x128xf32> -> vector<2x128xf32>
    %103 = arith.addf %101, %102 : vector<2x128xf32>
    %104 = arith.negf %103 : vector<2x128xf32>
    %105 = math.exp %104 : vector<2x128xf32>
    %cst_21 = arith.constant 1.000000e+00 : f32
    %106 = vector.broadcast %cst_21 : f32 to vector<2x128xf32>
    %107 = arith.addf %106, %105 : vector<2x128xf32>
    %108 = arith.divf %106, %107 : vector<2x128xf32>
    %109 = math.tanh %103 : vector<2x128xf32>
    %110 = vector.extract_strided_slice %108 {offsets = [0, 0], sizes = [2, 32], strides = [1, 1]} : vector<2x128xf32> to vector<2x32xf32>
    %111 = vector.extract_strided_slice %108 {offsets = [0, 32], sizes = [2, 32], strides = [1, 1]} : vector<2x128xf32> to vector<2x32xf32>
    %112 = vector.extract_strided_slice %109 {offsets = [0, 64], sizes = [2, 32], strides = [1, 1]} : vector<2x128xf32> to vector<2x32xf32>
    %113 = vector.extract_strided_slice %108 {offsets = [0, 96], sizes = [2, 32], strides = [1, 1]} : vector<2x128xf32> to vector<2x32xf32>
    %114 = arith.mulf %111, %98 : vector<2x32xf32>
    %115 = arith.mulf %110, %112 : vector<2x32xf32>
    %116 = arith.addf %114, %115 : vector<2x32xf32>
    %117 = math.tanh %116 : vector<2x32xf32>
    %118 = arith.mulf %113, %117 : vector<2x32xf32>
    %119 = vector.extract_strided_slice %8 {offsets = [12, 0], sizes = [2, 128], strides = [1, 1]} : vector<16x128xf32> to vector<2x128xf32>
    %cst_22 = arith.constant dense<0.000000e+00> : vector<2x128xf32>
    %120 = tpu.matmul %118, %1, %cst_22 {dimension_numbers = #tpu.dot_dimension_numbers<[1], [0], [0], [1], [0, 0, 1, 1], [], []>} : vector<2x32xf32>, vector<32x128xf32>, vector<2x128xf32> -> vector<2x128xf32>
    %121 = arith.addf %119, %120 : vector<2x128xf32>
    %122 = arith.negf %121 : vector<2x128xf32>
    %123 = math.exp %122 : vector<2x128xf32>
    %cst_23 = arith.constant 1.000000e+00 : f32
    %124 = vector.broadcast %cst_23 : f32 to vector<2x128xf32>
    %125 = arith.addf %124, %123 : vector<2x128xf32>
    %126 = arith.divf %124, %125 : vector<2x128xf32>
    %127 = math.tanh %121 : vector<2x128xf32>
    %128 = vector.extract_strided_slice %126 {offsets = [0, 0], sizes = [2, 32], strides = [1, 1]} : vector<2x128xf32> to vector<2x32xf32>
    %129 = vector.extract_strided_slice %126 {offsets = [0, 32], sizes = [2, 32], strides = [1, 1]} : vector<2x128xf32> to vector<2x32xf32>
    %130 = vector.extract_strided_slice %127 {offsets = [0, 64], sizes = [2, 32], strides = [1, 1]} : vector<2x128xf32> to vector<2x32xf32>
    %131 = vector.extract_strided_slice %126 {offsets = [0, 96], sizes = [2, 32], strides = [1, 1]} : vector<2x128xf32> to vector<2x32xf32>
    %132 = arith.mulf %129, %116 : vector<2x32xf32>
    %133 = arith.mulf %128, %130 : vector<2x32xf32>
    %134 = arith.addf %132, %133 : vector<2x32xf32>
    %135 = math.tanh %134 : vector<2x32xf32>
    %136 = arith.mulf %131, %135 : vector<2x32xf32>
    %137 = vector.extract_strided_slice %8 {offsets = [14, 0], sizes = [2, 128], strides = [1, 1]} : vector<16x128xf32> to vector<2x128xf32>
    %cst_24 = arith.constant dense<0.000000e+00> : vector<2x128xf32>
    %138 = tpu.matmul %136, %1, %cst_24 {dimension_numbers = #tpu.dot_dimension_numbers<[1], [0], [0], [1], [0, 0, 1, 1], [], []>} : vector<2x32xf32>, vector<32x128xf32>, vector<2x128xf32> -> vector<2x128xf32>
    %139 = arith.addf %137, %138 : vector<2x128xf32>
    %140 = arith.negf %139 : vector<2x128xf32>
    %141 = math.exp %140 : vector<2x128xf32>
    %cst_25 = arith.constant 1.000000e+00 : f32
    %142 = vector.broadcast %cst_25 : f32 to vector<2x128xf32>
    %143 = arith.addf %142, %141 : vector<2x128xf32>
    %144 = arith.divf %142, %143 : vector<2x128xf32>
    %145 = math.tanh %139 : vector<2x128xf32>
    %146 = vector.extract_strided_slice %144 {offsets = [0, 0], sizes = [2, 32], strides = [1, 1]} : vector<2x128xf32> to vector<2x32xf32>
    %147 = vector.extract_strided_slice %144 {offsets = [0, 32], sizes = [2, 32], strides = [1, 1]} : vector<2x128xf32> to vector<2x32xf32>
    %148 = vector.extract_strided_slice %145 {offsets = [0, 64], sizes = [2, 32], strides = [1, 1]} : vector<2x128xf32> to vector<2x32xf32>
    %149 = vector.extract_strided_slice %144 {offsets = [0, 96], sizes = [2, 32], strides = [1, 1]} : vector<2x128xf32> to vector<2x32xf32>
    %150 = arith.mulf %147, %134 : vector<2x32xf32>
    %151 = arith.mulf %146, %148 : vector<2x32xf32>
    %152 = arith.addf %150, %151 : vector<2x32xf32>
    %153 = math.tanh %152 : vector<2x32xf32>
    %154 = arith.mulf %149, %153 : vector<2x32xf32>
    %cst_26 = arith.constant dense<0.000000e+00> : vector<2x8xf32>
    %155 = tpu.matmul %154, %3, %cst_26 {dimension_numbers = #tpu.dot_dimension_numbers<[1], [0], [0], [1], [0, 0, 1, 1], [], []>} : vector<2x32xf32>, vector<32x8xf32>, vector<2x8xf32> -> vector<2x8xf32>
    %156 = vector.broadcast %4 : vector<1x8xf32> to vector<2x8xf32>
    %157 = arith.addf %155, %156 : vector<2x8xf32>
    %c0_27 = arith.constant 0 : index
    %c0_28 = arith.constant 0 : index
    %158 = vector.load %arg3[%c0_27, %c0_28] : memref<2x8xf32, #tpu.memory_space<vmem>>, vector<2x8xf32>
    tpu.vector_store %arg3[%c0_27, %c0_28], %157 {strides = array<i32>} : memref<2x8xf32, #tpu.memory_space<vmem>>, vector<2x8xf32>,
    return
  }
}

</mosaic_0001>

<llo_original>
// kernel: tpu_custom_call.1
$region0: #{tpu_custom_call.1}
  #allocation0 [shape = 'u32[]', space=smem, size = 0x4, offset = 0x4, fixed_abs, tag = 'smem constant byte address 0x4 - core index']
  #allocation1 [shape = 'u32[144,128]{1,0:T(1,128)}', space=vmem, size = 0x12000, scoped, tag = 'internal scratch']
  %s0 = inlined_call_operand.vmem [shape: f32[16,16], index: 0, kind: input, shape index: {}]
  %s1 = inlined_call_operand.hbm [shape: f32[49,128], index: 1, kind: input, shape index: {}]
  %s2 = inlined_call_operand.vmem [shape: f32[33,8], index: 2, kind: input, shape index: {}]
  %s3 = inlined_call_operand.hbm [shape: f32[2,8], index: 3, kind: output, shape index: {}]
  %s4 = sld [smem:[#allocation0]]
  $region26: #{tpu_custom_call.1} parent=0
    _
  %s6 = ssub.s32 1, %s4
  %s7 = scalar_select 0, %s6, %s4
  $region1: #{tpu_custom_call.1} parent=0
    #allocation2 [shape = 'u8[28672]{0}', space=vmem, size = 0x7000, scoped, tag = 'input window, operand 1, single buffered']
    #allocation3 [shape = 's32[1]{0}', space=sflag, size = 0x4, scoped, tag = 'scoped memory for tpu_custom_call.1']
    #allocation4 [shape = 's32[1]{0}', space=sflag, size = 0x4, scoped, tag = 'scoped memory for tpu_custom_call.1']
    #allocation5 [shape = 'u8[1024]{0}', space=vmem, size = 0x400, scoped, tag = 'output window, operand 0, single buffered']
    %8 = vsyncpa [#allocation3], 0
    %9 = vsyncpa [#allocation4], 0
    // Predicated region
    $region2: #{tpu_custom_call.1} parent=1 // pred_check
      _
    $region3: #{tpu_custom_call.1} parent=1 // pred_check_branch
      %11 = sbr.rel (0) target = $region5
    $region4: #{tpu_custom_call.1} parent=1 // pred_region
      _
    $region5: #{tpu_custom_call.1} parent=1 // pred_fallthru
      _
    // Predicated region
    $region6: #{tpu_custom_call.1} parent=1 // pred_check
      _
    $region7: #{tpu_custom_call.1} parent=1 // pred_check_branch
      %13 = sbr.rel (0) target = $region9
    $region8: #{tpu_custom_call.1} parent=1 // pred_region
      %s15 = ssub.s32 896, 896
      %16 = vsyncadd [#allocation3], %s15
      %s17 = sshll.u32 [#allocation2], 4
      %s18 = int_to_ptr.vmem [resolvable:$true] %s17
      %23 = dma.hbm_to_vmem [thread:$0]  %s1, 896, %s18, [#allocation3], 128, 128, 8
    $region9: #{tpu_custom_call.1} parent=1 // pred_fallthru
      _
    // Predicated region
    $region10: #{tpu_custom_call.1} parent=1 // pred_check
      _
    $region11: #{tpu_custom_call.1} parent=1 // pred_check_branch
      %25 = sbr.rel (0) target = $region13
    $region12: #{tpu_custom_call.1} parent=1 // pred_region
      _
    $region13: #{tpu_custom_call.1} parent=1 // pred_fallthru
      _
    // Predicated region
    $region14: #{tpu_custom_call.1} parent=1 // pred_check
      _
    $region15: #{tpu_custom_call.1} parent=1 // pred_check_branch
      %27 = sbr.rel (0) target = $region17
    $region16: #{tpu_custom_call.1} parent=1 // pred_region
      %28 = dma.done [#allocation3], 896
    $region17: #{tpu_custom_call.1} parent=1 // pred_fallthru
      _
    %v29 = vld [vmem:[#allocation2] sm:$0xff]
    %v30 = vld [vmem:[#allocation2 + $0x8] sm:$0xff]
    %v31 = vld [vmem:[#allocation2 + $0x10] sm:$0xff]
    %v32 = vld [vmem:[#allocation2 + $0x18] sm:$0xff]
    %v33 = vld [vmem:[#allocation2 + $0x20] sm:$0xff]
    %v34 = vld [vmem:[#allocation2 + $0x28] sm:$0xff]
    %v35 = vld [vmem:[#allocation2 + $0x30] sm:$0x1]
    %v36 = vld [vmem:[%s2] sm:$0xff]
    %v37 = vld [vmem:[%s2 + $0x8] sm:$0xff]
    %v38 = vld [vmem:[%s2 + $0x10] sm:$0xff]
    %v39 = vld [vmem:[%s2 + $0x18] sm:$0xff]
    %v40 = vld [vmem:[%s2 + $0x20] sm:$0x1]
    %v41 = vld [vmem:[%s0] sm:$0xff]
    %v42 = vld [vmem:[%s0 + $0x8] sm:$0xff]
    %v43 = vlaneseq
    %v44 = vshrl.u32 %v43, 7
    %v45 = vsub.s32 0, %v44
    %v46 = vrot.slane %v35, %v45
    %vm47 = vcmask 130048
    %v49 = vsel %vm47, %v41, 0
    %v52 = vsel %vm47, %v42, 0
    %54 = vmatprep.subr.mxu0 0.0
    %55 = vmatpush1.msra.mxu0 0.0
    %56 = vmatprep.subr.mxu0 0.0
    %57 = vmatpush1.msra.mxu0 0.0
    %58 = vmatprep.subr.mxu0 0.0
    %59 = vmatpush1.msra.mxu0 0.0
    %60 = vmatprep.subr.mxu0 0.0
    %61 = vmatpush1.msra.mxu0 0.0
    %62 = vmatprep.subr.mxu0 0.0
    %63 = vmatpush1.msra.mxu0 0.0
    %64 = vmatprep.subr.mxu0 0.0
    %65 = vmatpush1.msra.mxu0 0.0
    %66 = vmatprep.subr.mxu0 0.0
    %67 = vmatpush1.msra.mxu0 0.0
    %68 = vmatprep.subr.mxu0 0.0
    %69 = vmatpush1.msra.mxu0 0.0
    %70 = vmatprep.subr.mxu0 0.0
    %71 = vmatpush1.msra.mxu0 0.0
    %72 = vmatprep.subr.mxu0 0.0
    %73 = vmatpush1.msra.mxu0 0.0
    %74 = vmatprep.subr.mxu0 0.0
    %75 = vmatpush1.msra.mxu0 0.0
    %76 = vmatprep.subr.mxu0 0.0
    %77 = vmatpush1.msra.mxu0 0.0
    %78 = vmatprep.subr.mxu0 0.0
    %79 = vmatpush1.msra.mxu0 0.0
    %80 = vmatprep.subr.mxu0 0.0
    %81 = vmatpush1.msra.mxu0 0.0
    %82 = vmatprep.subr.mxu0 0.0
    %83 = vmatpush1.msra.mxu0 %v30
    %84 = vmatprep.subr.mxu0 0.0
    %85 = vmatpush1.msra.mxu0 %v29
    %86 = vmatprep.subr.mxu0 0.0
    %87 = vmatpush2.msra.mxu0 0.0
    %88 = vmatprep.subr.mxu0 0.0
    %89 = vmatpush2.msra.mxu0 0.0
    %90 = vmatprep.subr.mxu0 0.0
    %91 = vmatpush2.msra.mxu0 0.0
    %92 = vmatprep.subr.mxu0 0.0
    %93 = vmatpush2.msra.mxu0 0.0
    %94 = vmatprep.subr.mxu0 0.0
    %95 = vmatpush2.msra.mxu0 0.0
    %96 = vmatprep.subr.mxu0 0.0
    %97 = vmatpush2.msra.mxu0 0.0
    %98 = vmatprep.subr.mxu0 0.0
    %99 = vmatpush2.msra.mxu0 0.0
    %100 = vmatprep.subr.mxu0 0.0
    %101 = vmatpush2.msra.mxu0 0.0
    %102 = vmatprep.subr.mxu0 0.0
    %103 = vmatpush2.msra.mxu0 0.0
    %104 = vmatprep.subr.mxu0 0.0
    %105 = vmatpush2.msra.mxu0 0.0
    %106 = vmatprep.subr.mxu0 0.0
    %107 = vmatpush2.msra.mxu0 0.0
    %108 = vmatprep.subr.mxu0 0.0
    %109 = vmatpush2.msra.mxu0 0.0
    %110 = vmatprep.subr.mxu0 0.0
    %111 = vmatpush2.msra.mxu0 0.0
    %112 = vmatprep.subr.mxu0 0.0
    %113 = vmatpush2.msra.mxu0 0.0
    %114 = vmatprep.subr.mxu0 0.0
    %115 = vmatpush2.msra.mxu0 0.0
    %116 = vmatprep.subr.mxu0 0.0
    %117 = vmatpush2.msra.mxu0 0.0
    %118 = vmatprep.mubr.f32.mxu0 0.0
    %119 = vmatmul.mubr.f32.gmra.mxu0 %v49
    %v120 = vpop.f32.mrf.mxu0
    %v121 = vadd.f32 %v46, %v120
    %v122 = vpop.f32.mrf.mxu0
    %123 = vmatprep.mubr.f32.mxu0 0.0
    %124 = vmatmul.mubr.f32.gmra.mxu0 %v52
    %v125 = vpop.f32.mrf.mxu0
    %v126 = vadd.f32 %v46, %v125
    %v127 = vpop.f32.mrf.mxu0
    %128 = vdwg.mxu0
    %vm129 = vcmask 261120
    %v131 = vsel %vm129, 0.0, 0
    %133 = vmatprep.subr.mxu0 0.0
    %134 = vmatpush1.msra.mxu0 0.0
    %135 = vmatprep.subr.mxu0 0.0
    %136 = vmatpush1.msra.mxu0 0.0
    %137 = vmatprep.subr.mxu0 0.0
    %138 = vmatpush1.msra.mxu0 0.0
    %139 = vmatprep.subr.mxu0 0.0
    %140 = vmatpush1.msra.mxu0 0.0
    %141 = vmatprep.subr.mxu0 0.0
    %142 = vmatpush1.msra.mxu0 0.0
    %143 = vmatprep.subr.mxu0 0.0
    %144 = vmatpush1.msra.mxu0 0.0
    %145 = vmatprep.subr.mxu0 0.0
    %146 = vmatpush1.msra.mxu0 0.0
    %147 = vmatprep.subr.mxu0 0.0
    %148 = vmatpush1.msra.mxu0 0.0
    %149 = vmatprep.subr.mxu0 0.0
    %150 = vmatpush1.msra.mxu0 0.0
    %151 = vmatprep.subr.mxu0 0.0
    %152 = vmatpush1.msra.mxu0 0.0
    %153 = vmatprep.subr.mxu0 0.0
    %154 = vmatpush1.msra.mxu0 0.0
    %155 = vmatprep.subr.mxu0 0.0
    %156 = vmatpush1.msra.mxu0 0.0
    %157 = vmatprep.subr.mxu0 0.0
    %158 = vmatpush1.msra.mxu0 %v34
    %159 = vmatprep.subr.mxu0 0.0
    %160 = vmatpush1.msra.mxu0 %v33
    %161 = vmatprep.subr.mxu0 0.0
    %162 = vmatpush1.msra.mxu0 %v32
    %163 = vmatprep.subr.mxu0 0.0
    %164 = vmatpush1.msra.mxu0 %v31
    %165 = vmatprep.subr.mxu0 0.0
    %166 = vmatpush2.msra.mxu0 0.0
    %167 = vmatprep.subr.mxu0 0.0
    %168 = vmatpush2.msra.mxu0 0.0
    %169 = vmatprep.subr.mxu0 0.0
    %170 = vmatpush2.msra.mxu0 0.0
    %171 = vmatprep.subr.mxu0 0.0
    %172 = vmatpush2.msra.mxu0 0.0
    %173 = vmatprep.subr.mxu0 0.0
    %174 = vmatpush2.msra.mxu0 0.0
    %175 = vmatprep.subr.mxu0 0.0
    %176 = vmatpush2.msra.mxu0 0.0
    %177 = vmatprep.subr.mxu0 0.0
    %178 = vmatpush2.msra.mxu0 0.0
    %179 = vmatprep.subr.mxu0 0.0
    %180 = vmatpush2.msra.mxu0 0.0
    %181 = vmatprep.subr.mxu0 0.0
    %182 = vmatpush2.msra.mxu0 0.0
    %183 = vmatprep.subr.mxu0 0.0
    %184 = vmatpush2.msra.mxu0 0.0
    %185 = vmatprep.subr.mxu0 0.0
    %186 = vmatpush2.msra.mxu0 0.0
    %187 = vmatprep.subr.mxu0 0.0
    %188 = vmatpush2.msra.mxu0 0.0
    %189 = vmatprep.subr.mxu0 0.0
    %190 = vmatpush2.msra.mxu0 0.0
    %191 = vmatprep.subr.mxu0 0.0
    %192 = vmatpush2.msra.mxu0 0.0
    %193 = vmatprep.subr.mxu0 0.0
    %194 = vmatpush2.msra.mxu0 0.0
    %195 = vmatprep.subr.mxu0 0.0
    %196 = vmatpush2.msra.mxu0 0.0
    %197 = vmatprep.mubr.f32.mxu0 0.0
    %198 = vmatmul.mubr.f32.gmra.mxu0 %v131
    %v199 = vpop.f32.mrf.mxu0
    %v200 = vadd.f32 0.0, %v199
    %v201 = vpop.f32.mrf.mxu0
    %202 = vdwg.mxu0
    %v203 = vadd.f32 %v121, %v200
    %v204 = vxor.u32 %v203, 2147483648
    %v205 = vmul.f32 %v204, 1.442695
    %v206 = vpow.pop %v205
    %v207 = vadd.f32 %v206, 1.0
    %v208 = vrcp.pop %v207
    %v209 = vmul.f32 1.0, %v208
    %v210 = vtanh.pop %v203
    %v211 = vmul.f32 %v209, 0.0
    %213 = vrot.lane.b32.xlu0 %v210, 64
    %v214 = vpop.permute.xlu0 %213
    %v216 = vmul.f32 %v209, %v214
    %218 = vrot.lane.b32.xlu0 %v216, 32
    %v219 = vpop.permute.xlu0 %218
    %v221 = vadd.f32 %v211, %v219
    %v222 = vtanh.pop %v221
    %224 = vrot.lane.b32.xlu0 %v222, 64
    %v225 = vpop.permute.xlu0 %224
    %v227 = vmul.f32 %v209, %v225
    %229 = vrot.lane.b32.xlu0 %v227, 32
    %v230 = vpop.permute.xlu0 %229
    %v231 = vsel %vm129, %v230, 0
    %233 = vmatprep.subr.mxu0 0.0
    %234 = vmatpush1.msra.mxu0 0.0
    %235 = vmatprep.subr.mxu0 0.0
    %236 = vmatpush1.msra.mxu0 0.0
    %237 = vmatprep.subr.mxu0 0.0
    %238 = vmatpush1.msra.mxu0 0.0
    %239 = vmatprep.subr.mxu0 0.0
    %240 = vmatpush1.msra.mxu0 0.0
    %241 = vmatprep.subr.mxu0 0.0
    %242 = vmatpush1.msra.mxu0 0.0
    %243 = vmatprep.subr.mxu0 0.0
    %244 = vmatpush1.msra.mxu0 0.0
    %245 = vmatprep.subr.mxu0 0.0
    %246 = vmatpush1.msra.mxu0 0.0
    %247 = vmatprep.subr.mxu0 0.0
    %248 = vmatpush1.msra.mxu0 0.0
    %249 = vmatprep.subr.mxu0 0.0
    %250 = vmatpush1.msra.mxu0 0.0
    %251 = vmatprep.subr.mxu0 0.0
    %252 = vmatpush1.msra.mxu0 0.0
    %253 = vmatprep.subr.mxu0 0.0
    %254 = vmatpush1.msra.mxu0 0.0
    %255 = vmatprep.subr.mxu0 0.0
    %256 = vmatpush1.msra.mxu0 0.0
    %257 = vmatprep.subr.mxu0 0.0
    %258 = vmatpush1.msra.mxu0 %v34
    %259 = vmatprep.subr.mxu0 0.0
    %260 = vmatpush1.msra.mxu0 %v33
    %261 = vmatprep.subr.mxu0 0.0
    %262 = vmatpush1.msra.mxu0 %v32
    %263 = vmatprep.subr.mxu0 0.0
    %264 = vmatpush1.msra.mxu0 %v31
    %265 = vmatprep.subr.mxu0 0.0
    %266 = vmatpush2.msra.mxu0 0.0
    %267 = vmatprep.subr.mxu0 0.0
    %268 = vmatpush2.msra.mxu0 0.0
    %269 = vmatprep.subr.mxu0 0.0
    %270 = vmatpush2.msra.mxu0 0.0
    %271 = vmatprep.subr.mxu0 0.0
    %272 = vmatpush2.msra.mxu0 0.0
    %273 = vmatprep.subr.mxu0 0.0
    %274 = vmatpush2.msra.mxu0 0.0
    %275 = vmatprep.subr.mxu0 0.0
    %276 = vmatpush2.msra.mxu0 0.0
    %277 = vmatprep.subr.mxu0 0.0
    %278 = vmatpush2.msra.mxu0 0.0
    %279 = vmatprep.subr.mxu0 0.0
    %280 = vmatpush2.msra.mxu0 0.0
    %281 = vmatprep.subr.mxu0 0.0
    %282 = vmatpush2.msra.mxu0 0.0
    %283 = vmatprep.subr.mxu0 0.0
    %284 = vmatpush2.msra.mxu0 0.0
    %285 = vmatprep.subr.mxu0 0.0
    %286 = vmatpush2.msra.mxu0 0.0
    %287 = vmatprep.subr.mxu0 0.0
    %288 = vmatpush2.msra.mxu0 0.0
    %289 = vmatprep.subr.mxu0 0.0
    %290 = vmatpush2.msra.mxu0 0.0
    %291 = vmatprep.subr.mxu0 0.0
    %292 = vmatpush2.msra.mxu0 0.0
    %293 = vmatprep.subr.mxu0 0.0
    %294 = vmatpush2.msra.mxu0 0.0
    %295 = vmatprep.subr.mxu0 0.0
    %296 = vmatpush2.msra.mxu0 0.0
    %297 = vmatprep.mubr.f32.mxu0 0.0
    %298 = vmatmul.mubr.f32.gmra.mxu0 %v231
    %v299 = vpop.f32.mrf.mxu0
    %v300 = vadd.f32 0.0, %v299
    %v301 = vpop.f32.mrf.mxu0
    %302 = vdwg.mxu0
    %v304 = vrot.slane %v300, 6
    %v306 = vadd.f32 %v121, %v304
    %v307 = vxor.u32 %v306, 2147483648
    %v308 = vmul.f32 %v307, 1.442695
    %v309 = vpow.pop %v308
    %v310 = vadd.f32 %v309, 1.0
    %v311 = vrcp.pop %v310
    %v312 = vmul.f32 1.0, %v311
    %v313 = vtanh.pop %v306
    %v315 = vrot.slane %v221, 6
    %v317 = vmul.f32 %v312, %v315
    %319 = vrot.lane.b32.xlu0 %v313, 64
    %v320 = vpop.permute.xlu0 %319
    %v322 = vmul.f32 %v312, %v320
    %324 = vrot.lane.b32.xlu0 %v322, 32
    %v325 = vpop.permute.xlu0 %324
    %v327 = vadd.f32 %v317, %v325
    %v328 = vtanh.pop %v327
    %330 = vrot.lane.b32.xlu0 %v328, 64
    %v331 = vpop.permute.xlu0 %330
    %v333 = vmul.f32 %v312, %v331
    %v335 = vrot.slane %v333, 2
    %336 = vrot.lane.b32.xlu0 %v335, 32
    %v337 = vpop.permute.xlu0 %336
    %v338 = vsel %vm129, %v337, 0
    %340 = vmatprep.subr.mxu0 0.0
    %341 = vmatpush1.msra.mxu0 0.0
    %342 = vmatprep.subr.mxu0 0.0
    %343 = vmatpush1.msra.mxu0 0.0
    %344 = vmatprep.subr.mxu0 0.0
    %345 = vmatpush1.msra.mxu0 0.0
    %346 = vmatprep.subr.mxu0 0.0
    %347 = vmatpush1.msra.mxu0 0.0
    %348 = vmatprep.subr.mxu0 0.0
    %349 = vmatpush1.msra.mxu0 0.0
    %350 = vmatprep.subr.mxu0 0.0
    %351 = vmatpush1.msra.mxu0 0.0
    %352 = vmatprep.subr.mxu0 0.0
    %353 = vmatpush1.msra.mxu0 0.0
    %354 = vmatprep.subr.mxu0 0.0
    %355 = vmatpush1.msra.mxu0 0.0
    %356 = vmatprep.subr.mxu0 0.0
    %357 = vmatpush1.msra.mxu0 0.0
    %358 = vmatprep.subr.mxu0 0.0
    %359 = vmatpush1.msra.mxu0 0.0
    %360 = vmatprep.subr.mxu0 0.0
    %361 = vmatpush1.msra.mxu0 0.0
    %362 = vmatprep.subr.mxu0 0.0
    %363 = vmatpush1.msra.mxu0 0.0
    %364 = vmatprep.subr.mxu0 0.0
    %365 = vmatpush1.msra.mxu0 %v34
    %366 = vmatprep.subr.mxu0 0.0
    %367 = vmatpush1.msra.mxu0 %v33
    %368 = vmatprep.subr.mxu0 0.0
    %369 = vmatpush1.msra.mxu0 %v32
    %370 = vmatprep.subr.mxu0 0.0
    %371 = vmatpush1.msra.mxu0 %v31
    %372 = vmatprep.subr.mxu0 0.0
    %373 = vmatpush2.msra.mxu0 0.0
    %374 = vmatprep.subr.mxu0 0.0
    %375 = vmatpush2.msra.mxu0 0.0
    %376 = vmatprep.subr.mxu0 0.0
    %377 = vmatpush2.msra.mxu0 0.0
    %378 = vmatprep.subr.mxu0 0.0
    %379 = vmatpush2.msra.mxu0 0.0
    %380 = vmatprep.subr.mxu0 0.0
    %381 = vmatpush2.msra.mxu0 0.0
    %382 = vmatprep.subr.mxu0 0.0
    %383 = vmatpush2.msra.mxu0 0.0
    %384 = vmatprep.subr.mxu0 0.0
    %385 = vmatpush2.msra.mxu0 0.0
    %386 = vmatprep.subr.mxu0 0.0
    %387 = vmatpush2.msra.mxu0 0.0
    %388 = vmatprep.subr.mxu0 0.0
    %389 = vmatpush2.msra.mxu0 0.0
    %390 = vmatprep.subr.mxu0 0.0
    %391 = vmatpush2.msra.mxu0 0.0
    %392 = vmatprep.subr.mxu0 0.0
    %393 = vmatpush2.msra.mxu0 0.0
    %394 = vmatprep.subr.mxu0 0.0
    %395 = vmatpush2.msra.mxu0 0.0
    %396 = vmatprep.subr.mxu0 0.0
    %397 = vmatpush2.msra.mxu0 0.0
    %398 = vmatprep.subr.mxu0 0.0
    %399 = vmatpush2.msra.mxu0 0.0
    %400 = vmatprep.subr.mxu0 0.0
    %401 = vmatpush2.msra.mxu0 0.0
    %402 = vmatprep.subr.mxu0 0.0
    %403 = vmatpush2.msra.mxu0 0.0
    %404 = vmatprep.mubr.f32.mxu0 0.0
    %405 = vmatmul.mubr.f32.gmra.mxu0 %v338
    %v406 = vpop.f32.mrf.mxu0
    %v407 = vadd.f32 0.0, %v406
    %v408 = vpop.f32.mrf.mxu0
    %409 = vdwg.mxu0
    %v411 = vrot.slane %v407, 4
    %v413 = vadd.f32 %v121, %v411
    %v414 = vxor.u32 %v413, 2147483648
    %v415 = vmul.f32 %v414, 1.442695
    %v416 = vpow.pop %v415
    %v417 = vadd.f32 %v416, 1.0
    %v418 = vrcp.pop %v417
    %v419 = vmul.f32 1.0, %v418
    %v420 = vtanh.pop %v413
    %v422 = vrot.slane %v327, 6
    %v424 = vmul.f32 %v419, %v422
    %426 = vrot.lane.b32.xlu0 %v420, 64
    %v427 = vpop.permute.xlu0 %426
    %v429 = vmul.f32 %v419, %v427
    %431 = vrot.lane.b32.xlu0 %v429, 32
    %v432 = vpop.permute.xlu0 %431
    %v434 = vadd.f32 %v424, %v432
    %v435 = vtanh.pop %v434
    %437 = vrot.lane.b32.xlu0 %v435, 64
    %v438 = vpop.permute.xlu0 %437
    %v440 = vmul.f32 %v419, %v438
    %v442 = vrot.slane %v440, 4
    %443 = vrot.lane.b32.xlu0 %v442, 32
    %v444 = vpop.permute.xlu0 %443
    %v445 = vsel %vm129, %v444, 0
    %447 = vmatprep.subr.mxu0 0.0
    %448 = vmatpush1.msra.mxu0 0.0
    %449 = vmatprep.subr.mxu0 0.0
    %450 = vmatpush1.msra.mxu0 0.0
    %451 = vmatprep.subr.mxu0 0.0
    %452 = vmatpush1.msra.mxu0 0.0
    %453 = vmatprep.subr.mxu0 0.0
    %454 = vmatpush1.msra.mxu0 0.0
    %455 = vmatprep.subr.mxu0 0.0
    %456 = vmatpush1.msra.mxu0 0.0
    %457 = vmatprep.subr.mxu0 0.0
    %458 = vmatpush1.msra.mxu0 0.0
    %459 = vmatprep.subr.mxu0 0.0
    %460 = vmatpush1.msra.mxu0 0.0
    %461 = vmatprep.subr.mxu0 0.0
    %462 = vmatpush1.msra.mxu0 0.0
    %463 = vmatprep.subr.mxu0 0.0
    %464 = vmatpush1.msra.mxu0 0.0
    %465 = vmatprep.subr.mxu0 0.0
    %466 = vmatpush1.msra.mxu0 0.0
    %467 = vmatprep.subr.mxu0 0.0
    %468 = vmatpush1.msra.mxu0 0.0
    %469 = vmatprep.subr.mxu0 0.0
    %470 = vmatpush1.msra.mxu0 0.0
    %471 = vmatprep.subr.mxu0 0.0
    %472 = vmatpush1.msra.mxu0 %v34
    %473 = vmatprep.subr.mxu0 0.0
    %474 = vmatpush1.msra.mxu0 %v33
    %475 = vmatprep.subr.mxu0 0.0
    %476 = vmatpush1.msra.mxu0 %v32
    %477 = vmatprep.subr.mxu0 0.0
    %478 = vmatpush1.msra.mxu0 %v31
    %479 = vmatprep.subr.mxu0 0.0
    %480 = vmatpush2.msra.mxu0 0.0
    %481 = vmatprep.subr.mxu0 0.0
    %482 = vmatpush2.msra.mxu0 0.0
    %483 = vmatprep.subr.mxu0 0.0
    %484 = vmatpush2.msra.mxu0 0.0
    %485 = vmatprep.subr.mxu0 0.0
    %486 = vmatpush2.msra.mxu0 0.0
    %487 = vmatprep.subr.mxu0 0.0
    %488 = vmatpush2.msra.mxu0 0.0
    %489 = vmatprep.subr.mxu0 0.0
    %490 = vmatpush2.msra.mxu0 0.0
    %491 = vmatprep.subr.mxu0 0.0
    %492 = vmatpush2.msra.mxu0 0.0
    %493 = vmatprep.subr.mxu0 0.0
    %494 = vmatpush2.msra.mxu0 0.0
    %495 = vmatprep.subr.mxu0 0.0
    %496 = vmatpush2.msra.mxu0 0.0
    %497 = vmatprep.subr.mxu0 0.0
    %498 = vmatpush2.msra.mxu0 0.0
    %499 = vmatprep.subr.mxu0 0.0
    %500 = vmatpush2.msra.mxu0 0.0
    %501 = vmatprep.subr.mxu0 0.0
    %502 = vmatpush2.msra.mxu0 0.0
    %503 = vmatprep.subr.mxu0 0.0
    %504 = vmatpush2.msra.mxu0 0.0
    %505 = vmatprep.subr.mxu0 0.0
    %506 = vmatpush2.msra.mxu0 0.0
    %507 = vmatprep.subr.mxu0 0.0
    %508 = vmatpush2.msra.mxu0 0.0
    %509 = vmatprep.subr.mxu0 0.0
    %510 = vmatpush2.msra.mxu0 0.0
    %511 = vmatprep.mubr.f32.mxu0 0.0
    %512 = vmatmul.mubr.f32.gmra.mxu0 %v445
    %v513 = vpop.f32.mrf.mxu0
    %v514 = vadd.f32 0.0, %v513
    %v515 = vpop.f32.mrf.mxu0
    %516 = vdwg.mxu0
    %v518 = vrot.slane %v514, 2
    %v520 = vadd.f32 %v121, %v518
    %v521 = vxor.u32 %v520, 2147483648
    %v522 = vmul.f32 %v521, 1.442695
    %v523 = vpow.pop %v522
    %v524 = vadd.f32 %v523, 1.0
    %v525 = vrcp.pop %v524
    %v526 = vmul.f32 1.0, %v525
    %v527 = vtanh.pop %v520
    %v529 = vrot.slane %v434, 6
    %v531 = vmul.f32 %v526, %v529
    %533 = vrot.lane.b32.xlu0 %v527, 64
    %v534 = vpop.permute.xlu0 %533
    %v536 = vmul.f32 %v526, %v534
    %538 = vrot.lane.b32.xlu0 %v536, 32
    %v539 = vpop.permute.xlu0 %538
    %v541 = vadd.f32 %v531, %v539
    %v542 = vtanh.pop %v541
    %544 = vrot.lane.b32.xlu0 %v542, 64
    %v545 = vpop.permute.xlu0 %544
    %v547 = vmul.f32 %v526, %v545
    %v549 = vrot.slane %v547, 6
    %550 = vrot.lane.b32.xlu0 %v549, 32
    %v551 = vpop.permute.xlu0 %550
    %v552 = vsel %vm129, %v551, 0
    %554 = vmatprep.subr.mxu0 0.0
    %555 = vmatpush1.msra.mxu0 0.0
    %556 = vmatprep.subr.mxu0 0.0
    %557 = vmatpush1.msra.mxu0 0.0
    %558 = vmatprep.subr.mxu0 0.0
    %559 = vmatpush1.msra.mxu0 0.0
    %560 = vmatprep.subr.mxu0 0.0
    %561 = vmatpush1.msra.mxu0 0.0
    %562 = vmatprep.subr.mxu0 0.0
    %563 = vmatpush1.msra.mxu0 0.0
    %564 = vmatprep.subr.mxu0 0.0
    %565 = vmatpush1.msra.mxu0 0.0
    %566 = vmatprep.subr.mxu0 0.0
    %567 = vmatpush1.msra.mxu0 0.0
    %568 = vmatprep.subr.mxu0 0.0
    %569 = vmatpush1.msra.mxu0 0.0
    %570 = vmatprep.subr.mxu0 0.0
    %571 = vmatpush1.msra.mxu0 0.0
    %572 = vmatprep.subr.mxu0 0.0
    %573 = vmatpush1.msra.mxu0 0.0
    %574 = vmatprep.subr.mxu0 0.0
    %575 = vmatpush1.msra.mxu0 0.0
    %576 = vmatprep.subr.mxu0 0.0
    %577 = vmatpush1.msra.mxu0 0.0
    %578 = vmatprep.subr.mxu0 0.0
    %579 = vmatpush1.msra.mxu0 %v34
    %580 = vmatprep.subr.mxu0 0.0
    %581 = vmatpush1.msra.mxu0 %v33
    %582 = vmatprep.subr.mxu0 0.0
    %583 = vmatpush1.msra.mxu0 %v32
    %584 = vmatprep.subr.mxu0 0.0
    %585 = vmatpush1.msra.mxu0 %v31
    %586 = vmatprep.subr.mxu0 0.0
    %587 = vmatpush2.msra.mxu0 0.0
    %588 = vmatprep.subr.mxu0 0.0
    %589 = vmatpush2.msra.mxu0 0.0
    %590 = vmatprep.subr.mxu0 0.0
    %591 = vmatpush2.msra.mxu0 0.0
    %592 = vmatprep.subr.mxu0 0.0
    %593 = vmatpush2.msra.mxu0 0.0
    %594 = vmatprep.subr.mxu0 0.0
    %595 = vmatpush2.msra.mxu0 0.0
    %596 = vmatprep.subr.mxu0 0.0
    %597 = vmatpush2.msra.mxu0 0.0
    %598 = vmatprep.subr.mxu0 0.0
    %599 = vmatpush2.msra.mxu0 0.0
    %600 = vmatprep.subr.mxu0 0.0
    %601 = vmatpush2.msra.mxu0 0.0
    %602 = vmatprep.subr.mxu0 0.0
    %603 = vmatpush2.msra.mxu0 0.0
    %604 = vmatprep.subr.mxu0 0.0
    %605 = vmatpush2.msra.mxu0 0.0
    %606 = vmatprep.subr.mxu0 0.0
    %607 = vmatpush2.msra.mxu0 0.0
    %608 = vmatprep.subr.mxu0 0.0
    %609 = vmatpush2.msra.mxu0 0.0
    %610 = vmatprep.subr.mxu0 0.0
    %611 = vmatpush2.msra.mxu0 0.0
    %612 = vmatprep.subr.mxu0 0.0
    %613 = vmatpush2.msra.mxu0 0.0
    %614 = vmatprep.subr.mxu0 0.0
    %615 = vmatpush2.msra.mxu0 0.0
    %616 = vmatprep.subr.mxu0 0.0
    %617 = vmatpush2.msra.mxu0 0.0
    %618 = vmatprep.mubr.f32.mxu0 0.0
    %619 = vmatmul.mubr.f32.gmra.mxu0 %v552
    %v620 = vpop.f32.mrf.mxu0
    %v621 = vadd.f32 0.0, %v620
    %v622 = vpop.f32.mrf.mxu0
    %623 = vdwg.mxu0
    %v624 = vadd.f32 %v126, %v621
    %v625 = vxor.u32 %v624, 2147483648
    %v626 = vmul.f32 %v625, 1.442695
    %v627 = vpow.pop %v626
    %v628 = vadd.f32 %v627, 1.0
    %v629 = vrcp.pop %v628
    %v630 = vmul.f32 1.0, %v629
    %v631 = vtanh.pop %v624
    %v633 = vrot.slane %v541, 6
    %v635 = vmul.f32 %v630, %v633
    %637 = vrot.lane.b32.xlu0 %v631, 64
    %v638 = vpop.permute.xlu0 %637
    %v640 = vmul.f32 %v630, %v638
    %642 = vrot.lane.b32.xlu0 %v640, 32
    %v643 = vpop.permute.xlu0 %642
    %v645 = vadd.f32 %v635, %v643
    %v646 = vtanh.pop %v645
    %648 = vrot.lane.b32.xlu0 %v646, 64
    %v649 = vpop.permute.xlu0 %648
    %v651 = vmul.f32 %v630, %v649
    %653 = vrot.lane.b32.xlu0 %v651, 32
    %v654 = vpop.permute.xlu0 %653
    %v655 = vsel %vm129, %v654, 0
    %657 = vmatprep.subr.mxu0 0.0
    %658 = vmatpush1.msra.mxu0 0.0
    %659 = vmatprep.subr.mxu0 0.0
    %660 = vmatpush1.msra.mxu0 0.0
    %661 = vmatprep.subr.mxu0 0.0
    %662 = vmatpush1.msra.mxu0 0.0
    %663 = vmatprep.subr.mxu0 0.0
    %664 = vmatpush1.msra.mxu0 0.0
    %665 = vmatprep.subr.mxu0 0.0
    %666 = vmatpush1.msra.mxu0 0.0
    %667 = vmatprep.subr.mxu0 0.0
    %668 = vmatpush1.msra.mxu0 0.0
    %669 = vmatprep.subr.mxu0 0.0
    %670 = vmatpush1.msra.mxu0 0.0
    %671 = vmatprep.subr.mxu0 0.0
    %672 = vmatpush1.msra.mxu0 0.0
    %673 = vmatprep.subr.mxu0 0.0
    %674 = vmatpush1.msra.mxu0 0.0
    %675 = vmatprep.subr.mxu0 0.0
    %676 = vmatpush1.msra.mxu0 0.0
    %677 = vmatprep.subr.mxu0 0.0
    %678 = vmatpush1.msra.mxu0 0.0
    %679 = vmatprep.subr.mxu0 0.0
    %680 = vmatpush1.msra.mxu0 0.0
    %681 = vmatprep.subr.mxu0 0.0
    %682 = vmatpush1.msra.mxu0 %v34
    %683 = vmatprep.subr.mxu0 0.0
    %684 = vmatpush1.msra.mxu0 %v33
    %685 = vmatprep.subr.mxu0 0.0
    %686 = vmatpush1.msra.mxu0 %v32
    %687 = vmatprep.subr.mxu0 0.0
    %688 = vmatpush1.msra.mxu0 %v31
    %689 = vmatprep.subr.mxu0 0.0
    %690 = vmatpush2.msra.mxu0 0.0
    %691 = vmatprep.subr.mxu0 0.0
    %692 = vmatpush2.msra.mxu0 0.0
    %693 = vmatprep.subr.mxu0 0.0
    %694 = vmatpush2.msra.mxu0 0.0
    %695 = vmatprep.subr.mxu0 0.0
    %696 = vmatpush2.msra.mxu0 0.0
    %697 = vmatprep.subr.mxu0 0.0
    %698 = vmatpush2.msra.mxu0 0.0
    %699 = vmatprep.subr.mxu0 0.0
    %700 = vmatpush2.msra.mxu0 0.0
    %701 = vmatprep.subr.mxu0 0.0
    %702 = vmatpush2.msra.mxu0 0.0
    %703 = vmatprep.subr.mxu0 0.0
    %704 = vmatpush2.msra.mxu0 0.0
    %705 = vmatprep.subr.mxu0 0.0
    %706 = vmatpush2.msra.mxu0 0.0
    %707 = vmatprep.subr.mxu0 0.0
    %708 = vmatpush2.msra.mxu0 0.0
    %709 = vmatprep.subr.mxu0 0.0
    %710 = vmatpush2.msra.mxu0 0.0
    %711 = vmatprep.subr.mxu0 0.0
    %712 = vmatpush2.msra.mxu0 0.0
    %713 = vmatprep.subr.mxu0 0.0
    %714 = vmatpush2.msra.mxu0 0.0
    %715 = vmatprep.subr.mxu0 0.0
    %716 = vmatpush2.msra.mxu0 0.0
    %717 = vmatprep.subr.mxu0 0.0
    %718 = vmatpush2.msra.mxu0 0.0
    %719 = vmatprep.subr.mxu0 0.0
    %720 = vmatpush2.msra.mxu0 0.0
    %721 = vmatprep.mubr.f32.mxu0 0.0
    %722 = vmatmul.mubr.f32.gmra.mxu0 %v655
    %v723 = vpop.f32.mrf.mxu0
    %v724 = vadd.f32 0.0, %v723
    %v725 = vpop.f32.mrf.mxu0
    %726 = vdwg.mxu0
    %v728 = vrot.slane %v724, 6
    %v730 = vadd.f32 %v126, %v728
    %v731 = vxor.u32 %v730, 2147483648
    %v732 = vmul.f32 %v731, 1.442695
    %v733 = vpow.pop %v732
    %v734 = vadd.f32 %v733, 1.0
    %v735 = vrcp.pop %v734
    %v736 = vmul.f32 1.0, %v735
    %v737 = vtanh.pop %v730
    %v739 = vrot.slane %v645, 6
    %v741 = vmul.f32 %v736, %v739
    %743 = vrot.lane.b32.xlu0 %v737, 64
    %v744 = vpop.permute.xlu0 %743
    %v746 = vmul.f32 %v736, %v744
    %748 = vrot.lane.b32.xlu0 %v746, 32
    %v749 = vpop.permute.xlu0 %748
    %v751 = vadd.f32 %v741, %v749
    %v752 = vtanh.pop %v751
    %754 = vrot.lane.b32.xlu0 %v752, 64
    %v755 = vpop.permute.xlu0 %754
    %v757 = vmul.f32 %v736, %v755
    %v759 = vrot.slane %v757, 2
    %760 = vrot.lane.b32.xlu0 %v759, 32
    %v761 = vpop.permute.xlu0 %760
    %v762 = vsel %vm129, %v761, 0
    %764 = vmatprep.subr.mxu0 0.0
    %765 = vmatpush1.msra.mxu0 0.0
    %766 = vmatprep.subr.mxu0 0.0
    %767 = vmatpush1.msra.mxu0 0.0
    %768 = vmatprep.subr.mxu0 0.0
    %769 = vmatpush1.msra.mxu0 0.0
    %770 = vmatprep.subr.mxu0 0.0
    %771 = vmatpush1.msra.mxu0 0.0
    %772 = vmatprep.subr.mxu0 0.0
    %773 = vmatpush1.msra.mxu0 0.0
    %774 = vmatprep.subr.mxu0 0.0
    %775 = vmatpush1.msra.mxu0 0.0
    %776 = vmatprep.subr.mxu0 0.0
    %777 = vmatpush1.msra.mxu0 0.0
    %778 = vmatprep.subr.mxu0 0.0
    %779 = vmatpush1.msra.mxu0 0.0
    %780 = vmatprep.subr.mxu0 0.0
    %781 = vmatpush1.msra.mxu0 0.0
    %782 = vmatprep.subr.mxu0 0.0
    %783 = vmatpush1.msra.mxu0 0.0
    %784 = vmatprep.subr.mxu0 0.0
    %785 = vmatpush1.msra.mxu0 0.0
    %786 = vmatprep.subr.mxu0 0.0
    %787 = vmatpush1.msra.mxu0 0.0
    %788 = vmatprep.subr.mxu0 0.0
    %789 = vmatpush1.msra.mxu0 %v34
    %790 = vmatprep.subr.mxu0 0.0
    %791 = vmatpush1.msra.mxu0 %v33
    %792 = vmatprep.subr.mxu0 0.0
    %793 = vmatpush1.msra.mxu0 %v32
    %794 = vmatprep.subr.mxu0 0.0
    %795 = vmatpush1.msra.mxu0 %v31
    %796 = vmatprep.subr.mxu0 0.0
    %797 = vmatpush2.msra.mxu0 0.0
    %798 = vmatprep.subr.mxu0 0.0
    %799 = vmatpush2.msra.mxu0 0.0
    %800 = vmatprep.subr.mxu0 0.0
    %801 = vmatpush2.msra.mxu0 0.0
    %802 = vmatprep.subr.mxu0 0.0
    %803 = vmatpush2.msra.mxu0 0.0
    %804 = vmatprep.subr.mxu0 0.0
    %805 = vmatpush2.msra.mxu0 0.0
    %806 = vmatprep.subr.mxu0 0.0
    %807 = vmatpush2.msra.mxu0 0.0
    %808 = vmatprep.subr.mxu0 0.0
    %809 = vmatpush2.msra.mxu0 0.0
    %810 = vmatprep.subr.mxu0 0.0
    %811 = vmatpush2.msra.mxu0 0.0
    %812 = vmatprep.subr.mxu0 0.0
    %813 = vmatpush2.msra.mxu0 0.0
    %814 = vmatprep.subr.mxu0 0.0
    %815 = vmatpush2.msra.mxu0 0.0
    %816 = vmatprep.subr.mxu0 0.0
    %817 = vmatpush2.msra.mxu0 0.0
    %818 = vmatprep.subr.mxu0 0.0
    %819 = vmatpush2.msra.mxu0 0.0
    %820 = vmatprep.subr.mxu0 0.0
    %821 = vmatpush2.msra.mxu0 0.0
    %822 = vmatprep.subr.mxu0 0.0
    %823 = vmatpush2.msra.mxu0 0.0
    %824 = vmatprep.subr.mxu0 0.0
    %825 = vmatpush2.msra.mxu0 0.0
    %826 = vmatprep.subr.mxu0 0.0
    %827 = vmatpush2.msra.mxu0 0.0
    %828 = vmatprep.mubr.f32.mxu0 0.0
    %829 = vmatmul.mubr.f32.gmra.mxu0 %v762
    %v830 = vpop.f32.mrf.mxu0
    %v831 = vadd.f32 0.0, %v830
    %v832 = vpop.f32.mrf.mxu0
    %833 = vdwg.mxu0
    %v835 = vrot.slane %v831, 4
    %v837 = vadd.f32 %v126, %v835
    %v838 = vxor.u32 %v837, 2147483648
    %v839 = vmul.f32 %v838, 1.442695
    %v840 = vpow.pop %v839
    %v841 = vadd.f32 %v840, 1.0
    %v842 = vrcp.pop %v841
    %v843 = vmul.f32 1.0, %v842
    %v844 = vtanh.pop %v837
    %v846 = vrot.slane %v751, 6
    %v848 = vmul.f32 %v843, %v846
    %850 = vrot.lane.b32.xlu0 %v844, 64
    %v851 = vpop.permute.xlu0 %850
    %v853 = vmul.f32 %v843, %v851
    %855 = vrot.lane.b32.xlu0 %v853, 32
    %v856 = vpop.permute.xlu0 %855
    %v858 = vadd.f32 %v848, %v856
    %v859 = vtanh.pop %v858
    %861 = vrot.lane.b32.xlu0 %v859, 64
    %v862 = vpop.permute.xlu0 %861
    %v864 = vmul.f32 %v843, %v862
    %v866 = vrot.slane %v864, 4
    %867 = vrot.lane.b32.xlu0 %v866, 32
    %v868 = vpop.permute.xlu0 %867
    %v869 = vsel %vm129, %v868, 0
    %871 = vmatprep.subr.mxu0 0.0
    %872 = vmatpush1.msra.mxu0 0.0
    %873 = vmatprep.subr.mxu0 0.0
    %874 = vmatpush1.msra.mxu0 0.0
    %875 = vmatprep.subr.mxu0 0.0
    %876 = vmatpush1.msra.mxu0 0.0
    %877 = vmatprep.subr.mxu0 0.0
    %878 = vmatpush1.msra.mxu0 0.0
    %879 = vmatprep.subr.mxu0 0.0
    %880 = vmatpush1.msra.mxu0 0.0
    %881 = vmatprep.subr.mxu0 0.0
    %882 = vmatpush1.msra.mxu0 0.0
    %883 = vmatprep.subr.mxu0 0.0
    %884 = vmatpush1.msra.mxu0 0.0
    %885 = vmatprep.subr.mxu0 0.0
    %886 = vmatpush1.msra.mxu0 0.0
    %887 = vmatprep.subr.mxu0 0.0
    %888 = vmatpush1.msra.mxu0 0.0
    %889 = vmatprep.subr.mxu0 0.0
    %890 = vmatpush1.msra.mxu0 0.0
    %891 = vmatprep.subr.mxu0 0.0
    %892 = vmatpush1.msra.mxu0 0.0
    %893 = vmatprep.subr.mxu0 0.0
    %894 = vmatpush1.msra.mxu0 0.0
    %895 = vmatprep.subr.mxu0 0.0
    %896 = vmatpush1.msra.mxu0 %v34
    %897 = vmatprep.subr.mxu0 0.0
    %898 = vmatpush1.msra.mxu0 %v33
    %899 = vmatprep.subr.mxu0 0.0
    %900 = vmatpush1.msra.mxu0 %v32
    %901 = vmatprep.subr.mxu0 0.0
    %902 = vmatpush1.msra.mxu0 %v31
    %903 = vmatprep.subr.mxu0 0.0
    %904 = vmatpush2.msra.mxu0 0.0
    %905 = vmatprep.subr.mxu0 0.0
    %906 = vmatpush2.msra.mxu0 0.0
    %907 = vmatprep.subr.mxu0 0.0
    %908 = vmatpush2.msra.mxu0 0.0
    %909 = vmatprep.subr.mxu0 0.0
    %910 = vmatpush2.msra.mxu0 0.0
    %911 = vmatprep.subr.mxu0 0.0
    %912 = vmatpush2.msra.mxu0 0.0
    %913 = vmatprep.subr.mxu0 0.0
    %914 = vmatpush2.msra.mxu0 0.0
    %915 = vmatprep.subr.mxu0 0.0
    %916 = vmatpush2.msra.mxu0 0.0
    %917 = vmatprep.subr.mxu0 0.0
    %918 = vmatpush2.msra.mxu0 0.0
    %919 = vmatprep.subr.mxu0 0.0
    %920 = vmatpush2.msra.mxu0 0.0
    %921 = vmatprep.subr.mxu0 0.0
    %922 = vmatpush2.msra.mxu0 0.0
    %923 = vmatprep.subr.mxu0 0.0
    %924 = vmatpush2.msra.mxu0 0.0
    %925 = vmatprep.subr.mxu0 0.0
    %926 = vmatpush2.msra.mxu0 0.0
    %927 = vmatprep.subr.mxu0 0.0
    %928 = vmatpush2.msra.mxu0 0.0
    %929 = vmatprep.subr.mxu0 0.0
    %930 = vmatpush2.msra.mxu0 0.0
    %931 = vmatprep.subr.mxu0 0.0
    %932 = vmatpush2.msra.mxu0 0.0
    %933 = vmatprep.subr.mxu0 0.0
    %934 = vmatpush2.msra.mxu0 0.0
    %935 = vmatprep.mubr.f32.mxu0 0.0
    %936 = vmatmul.mubr.f32.gmra.mxu0 %v869
    %v937 = vpop.f32.mrf.mxu0
    %v938 = vadd.f32 0.0, %v937
    %v939 = vpop.f32.mrf.mxu0
    %940 = vdwg.mxu0
    %v942 = vrot.slane %v938, 2
    %v944 = vadd.f32 %v126, %v942
    %v945 = vxor.u32 %v944, 2147483648
    %v946 = vmul.f32 %v945, 1.442695
    %v947 = vpow.pop %v946
    %v948 = vadd.f32 %v947, 1.0
    %v949 = vrcp.pop %v948
    %v950 = vmul.f32 1.0, %v949
    %v951 = vtanh.pop %v944
    %v953 = vrot.slane %v858, 6
    %v955 = vmul.f32 %v950, %v953
    %957 = vrot.lane.b32.xlu0 %v951, 64
    %v958 = vpop.permute.xlu0 %957
    %v960 = vmul.f32 %v950, %v958
    %962 = vrot.lane.b32.xlu0 %v960, 32
    %v963 = vpop.permute.xlu0 %962
    %v965 = vadd.f32 %v955, %v963
    %v966 = vtanh.pop %v965
    %968 = vrot.lane.b32.xlu0 %v966, 64
    %v969 = vpop.permute.xlu0 %968
    %v971 = vmul.f32 %v950, %v969
    %v972 = vlaneseq
    %v973 = vshrl.u32 %v972, 7
    %v974 = vsub.s32 0, %v973
    %v975 = vrot.slane %v40, %v974
    %v977 = vrot.slane %v971, 6
    %978 = vrot.lane.b32.xlu0 %v977, 32
    %v979 = vpop.permute.xlu0 %978
    %v980 = vsel %vm129, %v979, 0
    %982 = vmatprep.subr.mxu0 0.0
    %983 = vmatpush1.msra.mxu0 0.0
    %984 = vmatprep.subr.mxu0 0.0
    %985 = vmatpush1.msra.mxu0 0.0
    %986 = vmatprep.subr.mxu0 0.0
    %987 = vmatpush1.msra.mxu0 0.0
    %988 = vmatprep.subr.mxu0 0.0
    %989 = vmatpush1.msra.mxu0 0.0
    %990 = vmatprep.subr.mxu0 0.0
    %991 = vmatpush1.msra.mxu0 0.0
    %992 = vmatprep.subr.mxu0 0.0
    %993 = vmatpush1.msra.mxu0 0.0
    %994 = vmatprep.subr.mxu0 0.0
    %995 = vmatpush1.msra.mxu0 0.0
    %996 = vmatprep.subr.mxu0 0.0
    %997 = vmatpush1.msra.mxu0 0.0
    %998 = vmatprep.subr.mxu0 0.0
    %999 = vmatpush1.msra.mxu0 0.0
    %1000 = vmatprep.subr.mxu0 0.0
    %1001 = vmatpush1.msra.mxu0 0.0
    %1002 = vmatprep.subr.mxu0 0.0
    %1003 = vmatpush1.msra.mxu0 0.0
    %1004 = vmatprep.subr.mxu0 0.0
    %1005 = vmatpush1.msra.mxu0 0.0
    %1006 = vmatprep.subr.mxu0 0.0
    %1007 = vmatpush1.msra.mxu0 %v39
    %1008 = vmatprep.subr.mxu0 0.0
    %1009 = vmatpush1.msra.mxu0 %v38
    %1010 = vmatprep.subr.mxu0 0.0
    %1011 = vmatpush1.msra.mxu0 %v37
    %1012 = vmatprep.subr.mxu0 0.0
    %1013 = vmatpush1.msra.mxu0 %v36
    %1014 = vmatprep.subr.mxu0 0.0
    %1015 = vmatpush2.msra.mxu0 0.0
    %1016 = vmatprep.subr.mxu0 0.0
    %1017 = vmatpush2.msra.mxu0 0.0
    %1018 = vmatprep.subr.mxu0 0.0
    %1019 = vmatpush2.msra.mxu0 0.0
    %1020 = vmatprep.subr.mxu0 0.0
    %1021 = vmatpush2.msra.mxu0 0.0
    %1022 = vmatprep.subr.mxu0 0.0
    %1023 = vmatpush2.msra.mxu0 0.0
    %1024 = vmatprep.subr.mxu0 0.0
    %1025 = vmatpush2.msra.mxu0 0.0
    %1026 = vmatprep.subr.mxu0 0.0
    %1027 = vmatpush2.msra.mxu0 0.0
    %1028 = vmatprep.subr.mxu0 0.0
    %1029 = vmatpush2.msra.mxu0 0.0
    %1030 = vmatprep.subr.mxu0 0.0
    %1031 = vmatpush2.msra.mxu0 0.0
    %1032 = vmatprep.subr.mxu0 0.0
    %1033 = vmatpush2.msra.mxu0 0.0
    %1034 = vmatprep.subr.mxu0 0.0
    %1035 = vmatpush2.msra.mxu0 0.0
    %1036 = vmatprep.subr.mxu0 0.0
    %1037 = vmatpush2.msra.mxu0 0.0
    %1038 = vmatprep.subr.mxu0 0.0
    %1039 = vmatpush2.msra.mxu0 0.0
    %1040 = vmatprep.subr.mxu0 0.0
    %1041 = vmatpush2.msra.mxu0 0.0
    %1042 = vmatprep.subr.mxu0 0.0
    %1043 = vmatpush2.msra.mxu0 0.0
    %1044 = vmatprep.subr.mxu0 0.0
    %1045 = vmatpush2.msra.mxu0 0.0
    %1046 = vmatprep.mubr.f32.mxu0 0.0
    %1047 = vmatmul.mubr.f32.gmra.mxu0 %v980
    %v1048 = vpop.f32.mrf.mxu0
    %v1049 = vadd.f32 %v975, %v1048
    %v1050 = vpop.f32.mrf.mxu0
    %1051 = vdwg.mxu0
    %vm1052 = vcmask 58368
    %1053 = vst.msk [vmem:[#allocation5] sm:$0x3] %vm1052, %v1049
    // Predicated region
    $region18: #{tpu_custom_call.1} parent=1 // pred_check
      _
    $region19: #{tpu_custom_call.1} parent=1 // pred_check_branch
      %1055 = sbr.rel (0) target = $region21
    $region20: #{tpu_custom_call.1} parent=1 // pred_region
      %s1057 = ssub.s32 32, 32
      %1058 = vsyncadd [#allocation4], %s1057
      %s1060 = sshll.u32 [#allocation5], 4
      %s1061 = int_to_ptr.vmem [resolvable:$true] %s1060
      %1063 = dma.vmem_to_hbm [thread:$0]  %s1061, 32, %s3, [#allocation4]
    $region21: #{tpu_custom_call.1} parent=1 // pred_fallthru
      _
    // Predicated region
    $region22: #{tpu_custom_call.1} parent=1 // pred_check
      _
    $region23: #{tpu_custom_call.1} parent=1 // pred_check_branch
      %1065 = sbr.rel (0) target = $region25
    $region24: #{tpu_custom_call.1} parent=1 // pred_region
      %1066 = dma.done [#allocation4], 32
    $region25: #{tpu_custom_call.1} parent=1 // pred_fallthru
      _
    %1067 = vsyncpa [#allocation3], 1
    %1068 = vsyncpa [#allocation4], 1

</llo_original>
